<compile_context>
chip_gen: v5e
topology: v5e:2x2
jax: 0.10.0
libtpu: 0.0.40
codegen_flags: <defaults>
</compile_context>

<pallas_src>
import jax
import jax.numpy as jnp
from jax.experimental import pallas as pl
from jax.experimental.pallas import tpu as pltpu

_LANES = 128
_DEFAULT_BLOCK_BYTES = 8 * 1024 * 1024     # ~roofline knee even at v7x HBM BW
_SPLIT_THRESHOLD_BYTES = 2 * 1024 * 1024   # force >=2 grid steps above this (dual-TC)
_VMEM_LIMIT_BYTES = 48 * 1024 * 1024       # 4 x 8 MiB resident + headroom (< 64 MiB)


def _ceil_kernel(x_ref, o_ref):
    # Elementwise ceil on the current VMEM tile; single VPU op, HBM-bound.
    o_ref[...] = jnp.ceil(x_ref[...])


def _round_up(v: int, m: int) -> int:
    return ((v + m - 1) // m) * m


def _ceil_small(x2d: jax.Array) -> jax.Array:
    """Single whole-array VMEM block (exempt from the (8,128) rule). For <128-elem pieces."""
    return pl.pallas_call(
        _ceil_kernel,
        out_shape=jax.ShapeDtypeStruct(x2d.shape, x2d.dtype),
        in_specs=[pl.BlockSpec(memory_space=pltpu.MemorySpace.VMEM)],
        out_specs=pl.BlockSpec(memory_space=pltpu.MemorySpace.VMEM),
    )(x2d)


def _ceil_2d(x2d: jax.Array, rows: int, itemsize: int, target_block_bytes: int) -> jax.Array:
    """Tiled ceil over a (rows, 128) array."""
    # Sublane multiple safe for packed dtypes: f32 -> 8, bf16 -> 16, fp8 -> 32.
    sub_mult = 8 * max(1, 4 // itemsize)

    # Byte-targeted tile rows (dtype-aware), rounded down to the sublane multiple.
    tile_rows = max(sub_mult,
                    (target_block_bytes // (_LANES * itemsize)) // sub_mult * sub_mult)

    total_bytes = rows * _LANES * itemsize
    if rows <= tile_rows:
        if total_bytes > _SPLIT_THRESHOLD_BYTES and rows > 2 * sub_mult:
            # Big enough to matter but fits one block: split into ~2 blocks so a
            # "parallel" grid can run on both v7x TensorCores concurrently.
            block_rows = min(rows, _round_up(pl.cdiv(rows, 2), sub_mult))
        else:
            # Small-input fast path: single full-array block (exempt from (8,128)),
            # one grid step, no pipeline overhead.
            block_rows = rows
    else:
        block_rows = tile_rows

    grid_steps = pl.cdiv(rows, block_rows)   # partial last block handled by Pallas

    return pl.pallas_call(
        _ceil_kernel,
        out_shape=jax.ShapeDtypeStruct((rows, _LANES), x2d.dtype),
        grid_spec=pltpu.PrefetchScalarGridSpec(
            num_scalar_prefetch=0,
            grid=(grid_steps,),
            in_specs=[pl.BlockSpec((block_rows, _LANES), lambda i: (i, 0))],
            out_specs=pl.BlockSpec((block_rows, _LANES), lambda i: (i, 0)),
        ),
        compiler_params=pltpu.CompilerParams(
            dimension_semantics=("parallel",),   # shard steps across v7x's 2 TCs
            vmem_limit_bytes=_VMEM_LIMIT_BYTES,
        ),
        cost_estimate=pl.CostEstimate(
            flops=0,
            transcendentals=0,
            bytes_accessed=2 * rows * _LANES * itemsize,   # one read + one write
        ),
        input_output_aliases={0: 0},   # same shape/dtype; lets XLA reuse the buffer
    )(x2d)


def ceil_pallas(x: jax.Array, *, target_block_bytes: int = _DEFAULT_BLOCK_BYTES) -> jax.Array:
    """torch.ceil equivalent for floating-point arrays of any shape."""
    if not jnp.issubdtype(x.dtype, jnp.floating):
        # torch.ceil rejects non-floating inputs; mirror that contract.
        raise TypeError(f"ceil_pallas requires a floating dtype, got {x.dtype}")

    orig_shape = x.shape
    n = x.size
    if n == 0:
        return x

    itemsize = jnp.dtype(x.dtype).itemsize
    x_flat = x.reshape(-1)
    aligned = (n // _LANES) * _LANES
    rem = n - aligned

    if rem == 0:
        # Common case (all NN-ish shapes): zero extra HBM passes.
        out2d = _ceil_2d(x_flat.reshape(-1, _LANES), n // _LANES, itemsize, target_block_bytes)
        return out2d.reshape(orig_shape)

    if aligned == 0:
        # Entire input is smaller than one lane row: single whole-array block.
        return _ceil_small(x_flat.reshape(1, n)).reshape(orig_shape)

    # Ragged size: kernel streams the 128-aligned prefix; the <=127-element tail
    # is a tiny single-block call. No full-array pad/strip passes anymore.
    prefix = _ceil_2d(x_flat[:aligned].reshape(-1, _LANES),
                      aligned // _LANES, itemsize, target_block_bytes)
    tail = _ceil_small(x_flat[aligned:].reshape(1, rem))
    return jnp.concatenate([prefix.reshape(-1), tail.reshape(-1)]).reshape(orig_shape)


if __name__ == "__main__":
    key = jax.random.PRNGKey(0)
    # Small NCHW input consistent with the elementwise test module.
    x = jax.random.normal(key, (2, 4, 16, 16), dtype=jnp.float32) * 5.0

    y = ceil_pallas(x)
    jax.block_until_ready(y)

    y_ref = jnp.ceil(x)
    assert y.shape == x.shape and y.dtype == x.dtype
    assert bool(jnp.all(y == y_ref))

    # Multi-step grid with a partial last 2-D block + ragged (<128-elem) tail path.
    x_rag = jax.random.normal(jax.random.PRNGKey(1), (3, 5, 33, 129), dtype=jnp.float32) * 7.0
    y_rag = ceil_pallas(x_rag, target_block_bytes=64 * 1024)
    jax.block_until_ready(y_rag)
    assert bool(jnp.all(y_rag == jnp.ceil(x_rag)))

    # Aligned and > 2 MiB: exercises the forced >=2-step (dual-TensorCore) split.
    x_mid = jax.random.normal(jax.random.PRNGKey(2), (1024, 1024), dtype=jnp.float32)
    y_mid = ceil_pallas(x_mid)
    jax.block_until_ready(y_mid)
    assert bool(jnp.all(y_mid == jnp.ceil(x_mid)))

    print("KERNEL_OK")
</pallas_src>

<mosaic_0001>
module attributes {stable_mosaic.version = 11 : i64} {
  func.func @_ceil_kernel(%arg0: i32, %arg1: memref<16x128xf32, #tpu.memory_space<vmem>>, %arg2: memref<16x128xf32, #tpu.memory_space<vmem>>) attributes {dimension_semantics = [#tpu.dimension_semantics<parallel>], iteration_bounds = array<i64: 1>, scalar_prefetch = 0 : i64, scratch_operands = 0 : i64, tpu.core_type = #tpu.core_type<tc>, window_params = [{transform_indices = @transform_0, window_bounds = array<i64: 16, 128>}, {transform_indices = @transform_1, window_bounds = array<i64: 16, 128>}]} {
    %c0 = arith.constant 0 : index
    %c0_0 = arith.constant 0 : index
    %0 = vector.load %arg1[%c0, %c0_0] : memref<16x128xf32, #tpu.memory_space<vmem>>, vector<16x128xf32>
    %1 = math.ceil %0 : vector<16x128xf32>
    %c0_1 = arith.constant 0 : index
    %c0_2 = arith.constant 0 : index
    %2 = vector.load %arg2[%c0_1, %c0_2] : memref<16x128xf32, #tpu.memory_space<vmem>>, vector<16x128xf32>
    tpu.vector_store %arg2[%c0_1, %c0_2], %1 {strides = array<i32>} : memref<16x128xf32, #tpu.memory_space<vmem>>, vector<16x128xf32>,
    return
  }
  func.func @transform_0(%arg0: i32) -> (i32, i32) {
    %c0_i32 = arith.constant 0 : i32
    %c0_i32_0 = arith.constant 0 : i32
    return %arg0, %c0_i32 : i32, i32
  }
  func.func @transform_1(%arg0: i32) -> (i32, i32) {
    %c0_i32 = arith.constant 0 : i32
    %c0_i32_0 = arith.constant 0 : i32
    return %arg0, %c0_i32 : i32, i32
  }
}

</mosaic_0001>

<llo_original>
// kernel: tpu_custom_call.1
$region0: #{tpu_custom_call.1}
  #allocation0 [shape = 'u32[]', space=smem, size = 0x4, offset = 0x4, fixed_abs, tag = 'smem constant byte address 0x4 - core index']
  #allocation1 [shape = 'u32[72,128]{1,0:T(1,128)}', space=vmem, size = 0x9000, scoped, tag = 'internal scratch']
  %s0 = inlined_call_operand.hbm [shape: f32[16,128], index: 0, kind: input, shape index: {}, may-alias: {0,1}]
  %s1 = inlined_call_operand.hbm [shape: f32[16,128], index: 1, kind: output, shape index: {}, may-alias: {0,1}]
  %s2 = sld [smem:[#allocation0]]
  $region18: #{tpu_custom_call.1} parent=0
    _
  %s4 = ssub.s32 1, %s2
  %s5 = scalar_select 0, %s4, %s2
  $region1: #{tpu_custom_call.1} parent=0
    #allocation2 [shape = 'u8[8192]{0}', space=vmem, size = 0x2000, scoped, tag = 'input window, operand 0, single buffered']
    #allocation3 [shape = 's32[1]{0}', space=sflag, size = 0x4, scoped, tag = 'scoped memory for tpu_custom_call.1']
    #allocation4 [shape = 's32[1]{0}', space=sflag, size = 0x4, scoped, tag = 'scoped memory for tpu_custom_call.1']
    #allocation5 [shape = 'u8[8192]{0}', space=vmem, size = 0x2000, scoped, tag = 'output window, operand 0, single buffered']
    %6 = vsyncpa [#allocation3], 0
    %7 = vsyncpa [#allocation4], 0
    // Predicated region
    $region2: #{tpu_custom_call.1} parent=1 // pred_check
      _
    $region3: #{tpu_custom_call.1} parent=1 // pred_check_branch
      %9 = sbr.rel (0) target = $region5
    $region4: #{tpu_custom_call.1} parent=1 // pred_region
      %11 = vsyncadd [#allocation3], 0
      %s12 = sshll.u32 %s0, 4
      %s13 = int_to_ptr.hbm [resolvable:$true] %s12
      %s14 = sshll.u32 [#allocation2], 4
      %s15 = int_to_ptr.vmem [resolvable:$true] %s14
      %20 = dma.hbm_to_vmem [thread:$0]  %s13, 256, %s15, [#allocation3], 128, 128, 8
    $region5: #{tpu_custom_call.1} parent=1 // pred_fallthru
      _
    // Predicated region
    $region6: #{tpu_custom_call.1} parent=1 // pred_check
      _
    $region7: #{tpu_custom_call.1} parent=1 // pred_check_branch
      %22 = sbr.rel (0) target = $region9
    $region8: #{tpu_custom_call.1} parent=1 // pred_region
      %24 = dma.done [#allocation3], 256
    $region9: #{tpu_custom_call.1} parent=1 // pred_fallthru
      _
    %v25 = vld [vmem:[#allocation2] sm:$0xff]
    %v26 = vld [vmem:[#allocation2 + $0x8] sm:$0xff]
    %v27 = vceil.f32 %v25
    %v28 = vceil.f32 %v26
    %29 = vst [vmem:[#allocation5] sm:$0xff] %v27
    %30 = vst [vmem:[#allocation5 + $0x8] sm:$0xff] %v28
    // Predicated region
    $region10: #{tpu_custom_call.1} parent=1 // pred_check
      _
    $region11: #{tpu_custom_call.1} parent=1 // pred_check_branch
      %32 = sbr.rel (0) target = $region13
    $region12: #{tpu_custom_call.1} parent=1 // pred_region
      %34 = vsyncadd [#allocation4], 0
      %s35 = sshll.u32 [#allocation5], 4
      %s36 = int_to_ptr.vmem [resolvable:$true] %s35
      %s37 = sshll.u32 %s1, 4
      %s38 = int_to_ptr.hbm [resolvable:$true] %s37
      %43 = dma.vmem_to_hbm [thread:$0]  %s36, 256, %s38, [#allocation4], 128, 128, 8
    $region13: #{tpu_custom_call.1} parent=1 // pred_fallthru
      _
    // Predicated region
    $region14: #{tpu_custom_call.1} parent=1 // pred_check
      _
    $region15: #{tpu_custom_call.1} parent=1 // pred_check_branch
      %45 = sbr.rel (0) target = $region17
    $region16: #{tpu_custom_call.1} parent=1 // pred_region
      %47 = dma.done [#allocation4], 256
    $region17: #{tpu_custom_call.1} parent=1 // pred_fallthru
      _
    %48 = vsyncpa [#allocation3], 1
    %49 = vsyncpa [#allocation4], 1

</llo_original>
